<compile_context>
chip_gen: v7x
topology: tpu7x:2x2x1
jax: 0.10.0
libtpu: 0.0.40
codegen_flags: <defaults>
</compile_context>

<pallas_src>
import functools

import jax
import jax.numpy as jnp
from jax import lax
from jax.experimental import pallas as pl
from jax.experimental.pallas import tpu as pltpu

LANE = 128
BATCH_ALIGN = 16          # bf16 sublane packing; also fine for f32 (needs 8)
VMEM_LIMIT = 32 * 1024 * 1024


def _round_up(n, m):
    return ((n + m - 1) // m) * m


def _cdiv(a, b):
    return -(-a // b)


# ---------------------------------------------------------------------------
# Parameter init (PyTorch nn.Linear default init) and lane-dense packing.
# ---------------------------------------------------------------------------
def init_odefunc_params(key, dim_in, hidden_dim, dim_out, dtype=jnp.float32):
    """uniform(-1/sqrt(fan_in), 1/sqrt(fan_in)); weights returned as [in, out]."""
    def linear(k, fan_in, fan_out):
        kw, kb = jax.random.split(k)
        bound = 1.0 / jnp.sqrt(jnp.asarray(fan_in, dtype))
        w = jax.random.uniform(kw, (fan_out, fan_in), dtype, -bound, bound).T
        b = jax.random.uniform(kb, (fan_out,), dtype, -bound, bound)
        return w, b

    k1, k2, k3 = jax.random.split(key, 3)
    w1, b1 = linear(k1, dim_in, hidden_dim)
    w2, b2 = linear(k2, hidden_dim, hidden_dim)
    w3, b3 = linear(k3, hidden_dim, dim_out)
    return dict(w1=w1, b1=b1, w2=w2, b2=b2, w3=w3, b3=b3)


def _pad2(a, rows, cols):
    return jnp.pad(a, ((0, rows - a.shape[0]), (0, cols - a.shape[1])))


def pack_params(params, compute_dtype=jnp.bfloat16):
    """Pad the hidden (internal) dim to a multiple of 128 lanes, cast matmul
    operands to bf16, and pack the three biases (f32) into one [8, fmax] block.

    w1 keeps its true row count (== dim_in) so x needs no lane padding, and
    w3 keeps its true column count (== dim_out) so the output needs no lane
    padding.  Padded hidden rows/cols and bias lanes are zero, so ReLU(0)=0
    and nothing leaks into the padded lanes.
    """
    din, dh = params["w1"].shape
    dout = params["w3"].shape[1]
    hp = _round_up(dh, LANE)
    fmax = max(hp, _round_up(dout, LANE))

    w1 = _pad2(params["w1"], din, hp).astype(compute_dtype)   # (din, hp)
    w2 = _pad2(params["w2"], hp, hp).astype(compute_dtype)    # (hp,  hp)
    w3 = _pad2(params["w3"], hp, dout).astype(compute_dtype)  # (hp,  dout)

    b = jnp.zeros((8, fmax), jnp.float32)
    b = b.at[0, :dh].set(params["b1"].astype(jnp.float32))
    b = b.at[1, :dh].set(params["b2"].astype(jnp.float32))
    b = b.at[2, :dout].set(params["b3"].astype(jnp.float32))
    return dict(w1=w1, w2=w2, w3=w3, b=b)


# ---------------------------------------------------------------------------
# Kernels
# ---------------------------------------------------------------------------
def _odefunc_kernel(x_ref, w1_ref, w2_ref, w3_ref, b_ref, o_ref):
    """One ODEfunc forward on a (tm, din) f32 tile; writes (tm, dout) f32."""
    hp = w2_ref.shape[0]
    dout = w3_ref.shape[1]
    cdt = w1_ref.dtype
    # fc1 + ReLU   (bf16 MXU operands, f32 accumulation; f32 epilogue)
    h = jnp.dot(x_ref[...].astype(cdt), w1_ref[...],
                preferred_element_type=jnp.float32)
    h = jnp.maximum(h + b_ref[0:1, :hp], 0.0)
    # fc2 + ReLU
    h = jnp.dot(h.astype(cdt), w2_ref[...], preferred_element_type=jnp.float32)
    h = jnp.maximum(h + b_ref[1:2, :hp], 0.0)
    # fc3 + Tanh
    h = jnp.dot(h.astype(cdt), w3_ref[...], preferred_element_type=jnp.float32)
    o_ref[...] = jnp.tanh(h + b_ref[2:3, :dout]).astype(o_ref.dtype)


def _make_euler_fused_kernel(num_steps, dt, unroll):
    """num_steps forward-Euler steps x <- x + dt * ODEfunc(t, x) in one kernel.
    Weights/biases are loaded once; the ODE state stays f32 end-to-end."""
    def kernel(x_ref, w1_ref, w2_ref, w3_ref, b_ref, o_ref):
        tm, din = x_ref.shape
        hp = w2_ref.shape[0]
        dout = w3_ref.shape[1]
        cdt = w1_ref.dtype
        w1 = w1_ref[...]
        w2 = w2_ref[...]
        w3 = w3_ref[...]
        # Hoist bias broadcasts out of the (possibly unrolled) loop: JAX does
        # not CSE broadcast_in_dim, so doing it inside f() would emit
        # 3*num_steps broadcasts.
        b1 = jnp.broadcast_to(b_ref[0:1, :hp], (tm, hp))
        b2 = jnp.broadcast_to(b_ref[1:2, :hp], (tm, hp))
        b3 = jnp.broadcast_to(b_ref[2:3, :dout], (tm, dout))

        def f(xk):
            h = jnp.dot(xk.astype(cdt), w1, preferred_element_type=jnp.float32)
            h = jnp.maximum(h + b1, 0.0)
            h = jnp.dot(h.astype(cdt), w2, preferred_element_type=jnp.float32)
            h = jnp.maximum(h + b2, 0.0)
            h = jnp.dot(h.astype(cdt), w3, preferred_element_type=jnp.float32)
            return jnp.tanh(h + b3)

        x0 = x_ref[...].astype(jnp.float32)
        xN = lax.fori_loop(0, num_steps, lambda _, xk: xk + dt * f(xk), x0,
                           unroll=unroll)
        o_ref[...] = xN.astype(o_ref.dtype)

    return kernel


# ---------------------------------------------------------------------------
# Wrappers
# ---------------------------------------------------------------------------
def _choose_tile(batch, block_rows):
    """Split batch into roughly equal tiles so that pad < one tile."""
    nblk = max(1, _cdiv(batch, block_rows))
    tm = _round_up(_cdiv(batch, nblk), BATCH_ALIGN)
    bp = _round_up(batch, tm)
    return tm, bp


def _specs(tm, din, dout, w1, w2, w3, b):
    in_specs = [
        pl.BlockSpec((tm, din), lambda i: (i, 0)),      # x marches over batch
        pl.BlockSpec(w1.shape, lambda i: (0, 0)),       # weights: constant maps
        pl.BlockSpec(w2.shape, lambda i: (0, 0)),       #   -> DMA'd once, resident
        pl.BlockSpec(w3.shape, lambda i: (0, 0)),
        pl.BlockSpec(b.shape, lambda i: (0, 0)),
    ]
    out_specs = pl.BlockSpec((tm, dout), lambda i: (i, 0))
    return in_specs, out_specs


@functools.partial(jax.jit, static_argnames=("block_rows",))
def odefunc_forward(t, x, packed, block_rows=2048):
    """Equivalent of ODEfunc.forward(t, x).  `t` is unused (as in the module)."""
    del t
    B, din = x.shape
    w1, w2, w3, b = packed["w1"], packed["w2"], packed["w3"], packed["b"]
    hp = w2.shape[0]
    dout = w3.shape[1]

    tm, bp = _choose_tile(B, block_rows)
    xp = x if bp == B else jnp.pad(x, ((0, bp - B), (0, 0)))

    in_specs, out_specs = _specs(tm, din, dout, w1, w2, w3, b)
    flops = 2 * bp * (din * hp + hp * hp + hp * dout)
    bytes_accessed = (xp.size * 4 + w1.size * 2 + w2.size * 2 + w3.size * 2
                      + b.size * 4 + bp * dout * 4)

    out = pl.pallas_call(
        _odefunc_kernel,
        out_shape=jax.ShapeDtypeStruct((bp, dout), x.dtype),
        grid_spec=pltpu.PrefetchScalarGridSpec(
            num_scalar_prefetch=0,
            grid=(bp // tm,),
            in_specs=in_specs,
            out_specs=out_specs,
        ),
        compiler_params=pltpu.CompilerParams(
            dimension_semantics=("parallel",),
            vmem_limit_bytes=VMEM_LIMIT),
        cost_estimate=pl.CostEstimate(flops=flops, transcendentals=bp * dout,
                                      bytes_accessed=bytes_accessed),
    )(xp, w1, w2, w3, b)
    return out if bp == B else out[:B]


@functools.partial(jax.jit, static_argnames=("num_steps", "dt", "block_rows"))
def odefunc_euler_fused(t0, x, packed, num_steps, dt, block_rows=2048):
    """N fused forward-Euler steps of dx/dt = ODEfunc(t, x) in ONE pallas_call.
    Requires dim_in == dim_out.  State stays f32; weights resident in VMEM."""
    del t0
    B, din = x.shape
    w1, w2, w3, b = packed["w1"], packed["w2"], packed["w3"], packed["b"]
    hp = w2.shape[0]
    dout = w3.shape[1]
    assert din == dout, "Euler fusion needs dim_in == dim_out"

    tm, bp = _choose_tile(B, block_rows)
    xp = x if bp == B else jnp.pad(x, ((0, bp - B), (0, 0)))

    in_specs, out_specs = _specs(tm, din, dout, w1, w2, w3, b)
    flops = 2 * bp * (din * hp + hp * hp + hp * dout) * num_steps
    bytes_accessed = (xp.size * 4 + w1.size * 2 + w2.size * 2 + w3.size * 2
                      + b.size * 4 + bp * dout * 4)

    unroll = True if num_steps <= 8 else 4   # bound code-size / vreg pressure

    out = pl.pallas_call(
        _make_euler_fused_kernel(num_steps, float(dt), unroll),
        out_shape=jax.ShapeDtypeStruct((bp, dout), jnp.float32),
        grid_spec=pltpu.PrefetchScalarGridSpec(
            num_scalar_prefetch=0,
            grid=(bp // tm,),
            in_specs=in_specs,
            out_specs=out_specs,
        ),
        compiler_params=pltpu.CompilerParams(
            dimension_semantics=("parallel",),
            vmem_limit_bytes=VMEM_LIMIT),
        cost_estimate=pl.CostEstimate(flops=flops,
                                      transcendentals=bp * dout * num_steps,
                                      bytes_accessed=bytes_accessed),
    )(xp, w1, w2, w3, b)
    out = out if bp == B else out[:B]
    return out.astype(x.dtype)


# ---------------------------------------------------------------------------
if __name__ == "__main__":
    B, dim_in, hidden_dim, dim_out = 8, 32, 64, 32

    key = jax.random.PRNGKey(0)
    k_params, k_x = jax.random.split(key)

    params = init_odefunc_params(k_params, dim_in, hidden_dim, dim_out)
    packed = pack_params(params)  # lane-dense bf16 weights + packed f32 biases
    x = jax.random.normal(k_x, (B, dim_in), dtype=jnp.float32)
    t = jnp.float32(0.0)  # ignored by forward, present for API parity

    # ---- single forward (matches ODEfunc.forward) --------------------------
    out = jax.block_until_ready(odefunc_forward(t, x, packed))

    def ref_forward(xv):
        h = jnp.maximum(xv @ params["w1"] + params["b1"], 0.0)
        h = jnp.maximum(h @ params["w2"] + params["b2"], 0.0)
        return jnp.tanh(h @ params["w3"] + params["b3"])

    ref = ref_forward(x)
    assert out.shape == (B, dim_out), out.shape
    # bf16 MXU operands (f32 accumulate) -> relaxed tolerance vs f32 reference.
    assert jnp.allclose(out, ref, atol=3e-2, rtol=3e-2), float(
        jnp.max(jnp.abs(out - ref)))

    # ---- fused multi-evaluation (amortizes launch + weight DMA) -------------
    num_steps, dt = 4, 0.1
    out_e = jax.block_until_ready(
        odefunc_euler_fused(t, x, packed, num_steps=num_steps, dt=dt))
    ref_e = x
    for _ in range(num_steps):
        ref_e = ref_e + dt * ref_forward(ref_e)
    assert out_e.shape == (B, dim_in), out_e.shape
    assert jnp.allclose(out_e, ref_e, atol=5e-2, rtol=5e-2), float(
        jnp.max(jnp.abs(out_e - ref_e)))

    print("KERNEL_OK")
</pallas_src>

<mosaic_0001>
module attributes {stable_mosaic.version = 11 : i64} {
  func.func @_odefunc_kernel(%arg0: i32, %arg1: memref<16x32xf32, #tpu.memory_space<vmem>>, %arg2: memref<32x128xbf16, #tpu.memory_space<vmem>>, %arg3: memref<128x128xbf16, #tpu.memory_space<vmem>>, %arg4: memref<128x32xbf16, #tpu.memory_space<vmem>>, %arg5: memref<8x128xf32, #tpu.memory_space<vmem>>, %arg6: memref<16x32xf32, #tpu.memory_space<vmem>>) attributes {dimension_semantics = [#tpu.dimension_semantics<parallel>], iteration_bounds = array<i64: 1>, scalar_prefetch = 0 : i64, scratch_operands = 0 : i64, tpu.core_type = #tpu.core_type<tc>, window_params = [{transform_indices = @transform_0, window_bounds = array<i64: 16, 32>}, {pipeline_mode = #tpu.pipeline_mode<synchronous>, transform_indices = @transform_1, window_bounds = array<i64: 32, 128>}, {pipeline_mode = #tpu.pipeline_mode<synchronous>, transform_indices = @transform_2, window_bounds = array<i64: 128, 128>}, {pipeline_mode = #tpu.pipeline_mode<synchronous>, transform_indices = @transform_3, window_bounds = array<i64: 128, 32>}, {pipeline_mode = #tpu.pipeline_mode<synchronous>, transform_indices = @transform_4, window_bounds = array<i64: 8, 128>}, {transform_indices = @transform_5, window_bounds = array<i64: 16, 32>}]} {
    %c0 = arith.constant 0 : index
    %c0_0 = arith.constant 0 : index
    %0 = vector.load %arg1[%c0, %c0_0] : memref<16x32xf32, #tpu.memory_space<vmem>>, vector<16x32xf32>
    %1 = arith.truncf %0 : vector<16x32xf32> to vector<16x32xbf16>
    %c0_1 = arith.constant 0 : index
    %c0_2 = arith.constant 0 : index
    %2 = vector.load %arg2[%c0_1, %c0_2] : memref<32x128xbf16, #tpu.memory_space<vmem>>, vector<32x128xbf16>
    %cst = arith.constant dense<0.000000e+00> : vector<16x128xf32>
    %3 = tpu.matmul %1, %2, %cst {dimension_numbers = #tpu.dot_dimension_numbers<[1], [0], [0], [1], [0, 0, 1, 1], [], []>} : vector<16x32xbf16>, vector<32x128xbf16>, vector<16x128xf32> -> vector<16x128xf32>
    %c0_3 = arith.constant 0 : index
    %c0_4 = arith.constant 0 : index
    %4 = vector.load %arg5[%c0_3, %c0_4] : memref<8x128xf32, #tpu.memory_space<vmem>>, vector<1x128xf32>
    %5 = vector.broadcast %4 : vector<1x128xf32> to vector<16x128xf32>
    %6 = arith.addf %3, %5 : vector<16x128xf32>
    %cst_5 = arith.constant 0.000000e+00 : f32
    %7 = vector.broadcast %cst_5 : f32 to vector<16x128xf32>
    %8 = arith.maximumf %6, %7 : vector<16x128xf32>
    %9 = arith.truncf %8 : vector<16x128xf32> to vector<16x128xbf16>
    %c0_6 = arith.constant 0 : index
    %c0_7 = arith.constant 0 : index
    %10 = vector.load %arg3[%c0_6, %c0_7] : memref<128x128xbf16, #tpu.memory_space<vmem>>, vector<128x128xbf16>
    %cst_8 = arith.constant dense<0.000000e+00> : vector<16x128xf32>
    %11 = tpu.matmul %9, %10, %cst_8 {dimension_numbers = #tpu.dot_dimension_numbers<[1], [0], [0], [1], [0, 0, 1, 1], [], []>} : vector<16x128xbf16>, vector<128x128xbf16>, vector<16x128xf32> -> vector<16x128xf32>
    %c1 = arith.constant 1 : index
    %c0_9 = arith.constant 0 : index
    %12 = vector.load %arg5[%c1, %c0_9] : memref<8x128xf32, #tpu.memory_space<vmem>>, vector<1x128xf32>
    %13 = vector.broadcast %12 : vector<1x128xf32> to vector<16x128xf32>
    %14 = arith.addf %11, %13 : vector<16x128xf32>
    %cst_10 = arith.constant 0.000000e+00 : f32
    %15 = vector.broadcast %cst_10 : f32 to vector<16x128xf32>
    %16 = arith.maximumf %14, %15 : vector<16x128xf32>
    %17 = arith.truncf %16 : vector<16x128xf32> to vector<16x128xbf16>
    %c0_11 = arith.constant 0 : index
    %c0_12 = arith.constant 0 : index
    %18 = vector.load %arg4[%c0_11, %c0_12] : memref<128x32xbf16, #tpu.memory_space<vmem>>, vector<128x32xbf16>
    %cst_13 = arith.constant dense<0.000000e+00> : vector<16x32xf32>
    %19 = tpu.matmul %17, %18, %cst_13 {dimension_numbers = #tpu.dot_dimension_numbers<[1], [0], [0], [1], [0, 0, 1, 1], [], []>} : vector<16x128xbf16>, vector<128x32xbf16>, vector<16x32xf32> -> vector<16x32xf32>
    %c2 = arith.constant 2 : index
    %c0_14 = arith.constant 0 : index
    %20 = vector.load %arg5[%c2, %c0_14] : memref<8x128xf32, #tpu.memory_space<vmem>>, vector<1x32xf32>
    %21 = vector.broadcast %20 : vector<1x32xf32> to vector<16x32xf32>
    %22 = arith.addf %19, %21 : vector<16x32xf32>
    %23 = math.tanh %22 : vector<16x32xf32>
    %c0_15 = arith.constant 0 : index
    %c0_16 = arith.constant 0 : index
    %24 = vector.load %arg6[%c0_15, %c0_16] : memref<16x32xf32, #tpu.memory_space<vmem>>, vector<16x32xf32>
    tpu.vector_store %arg6[%c0_15, %c0_16], %23 {strides = array<i32>} : memref<16x32xf32, #tpu.memory_space<vmem>>, vector<16x32xf32>,
    return
  }
  func.func @transform_0(%arg0: i32) -> (i32, i32) {
    %c0_i32 = arith.constant 0 : i32
    %c0_i32_0 = arith.constant 0 : i32
    return %arg0, %c0_i32 : i32, i32
  }
  func.func @transform_1(%arg0: i32) -> (i32, i32) {
    %c0_i32 = arith.constant 0 : i32
    %c0_i32_0 = arith.constant 0 : i32
    %c0_i32_1 = arith.constant 0 : i32
    return %c0_i32, %c0_i32_0 : i32, i32
  }
  func.func @transform_2(%arg0: i32) -> (i32, i32) {
    %c0_i32 = arith.constant 0 : i32
    %c0_i32_0 = arith.constant 0 : i32
    %c0_i32_1 = arith.constant 0 : i32
    return %c0_i32, %c0_i32_0 : i32, i32
  }
  func.func @transform_3(%arg0: i32) -> (i32, i32) {
    %c0_i32 = arith.constant 0 : i32
    %c0_i32_0 = arith.constant 0 : i32
    %c0_i32_1 = arith.constant 0 : i32
    return %c0_i32, %c0_i32_0 : i32, i32
  }
  func.func @transform_4(%arg0: i32) -> (i32, i32) {
    %c0_i32 = arith.constant 0 : i32
    %c0_i32_0 = arith.constant 0 : i32
    %c0_i32_1 = arith.constant 0 : i32
    return %c0_i32, %c0_i32_0 : i32, i32
  }
  func.func @transform_5(%arg0: i32) -> (i32, i32) {
    %c0_i32 = arith.constant 0 : i32
    %c0_i32_0 = arith.constant 0 : i32
    return %arg0, %c0_i32 : i32, i32
  }
}

</mosaic_0001>

<llo_original>
// kernel: odefunc_forward.1
$region0: #{odefunc_forward.1}
  #allocation0 [shape = 'u32[]', space=smem, size = 0x4, offset = 0x4, fixed_abs, tag = 'smem constant byte address 0x4 - core index']
  #allocation1 [shape = 'u32[144,128]{1,0:T(1,128)}', space=vmem, size = 0x12000, scoped, tag = 'internal scratch']
  %s0 = inlined_call_operand.vmem [shape: f32[16,32], index: 0, kind: input, shape index: {}]
  %s1 = inlined_call_operand.vmem [shape: bf16[32,128], index: 1, kind: input, shape index: {}]
  %s2 = inlined_call_operand.vmem [shape: bf16[128,128], index: 2, kind: input, shape index: {}]
  %s3 = inlined_call_operand.vmem [shape: bf16[128,32], index: 3, kind: input, shape index: {}]
  %s4 = inlined_call_operand.vmem [shape: f32[8,128], index: 4, kind: input, shape index: {}]
  %s5 = inlined_call_operand.vmem [shape: f32[16,32], index: 5, kind: output, shape index: {}]
  %s6 = sld [smem:[#allocation0]]
  $region30: #{odefunc_forward.1} parent=0
    _
  %s8 = ssub.s32 1, %s6
  %s9 = scalar_select 0, %s8, %s6
  // Predicated region
  $region2: #{odefunc_forward.1} parent=0 // pred_check
    _
  $region3: #{odefunc_forward.1} parent=0 // pred_check_branch
    %11 = sbr.rel (0) target = $region5
  $region4: #{odefunc_forward.1} parent=0 // pred_region
    _
  $region5: #{odefunc_forward.1} parent=0 // pred_fallthru
    _
  // Predicated region
  $region6: #{odefunc_forward.1} parent=0 // pred_check
    _
  $region7: #{odefunc_forward.1} parent=0 // pred_check_branch
    %13 = sbr.rel (0) target = $region9
  $region8: #{odefunc_forward.1} parent=0 // pred_region
    _
  $region9: #{odefunc_forward.1} parent=0 // pred_fallthru
    _
  // Predicated region
  $region10: #{odefunc_forward.1} parent=0 // pred_check
    _
  $region11: #{odefunc_forward.1} parent=0 // pred_check_branch
    %15 = sbr.rel (0) target = $region13
  $region12: #{odefunc_forward.1} parent=0 // pred_region
    _
  $region13: #{odefunc_forward.1} parent=0 // pred_fallthru
    _
  // Predicated region
  $region14: #{odefunc_forward.1} parent=0 // pred_check
    _
  $region15: #{odefunc_forward.1} parent=0 // pred_check_branch
    %17 = sbr.rel (0) target = $region17
  $region16: #{odefunc_forward.1} parent=0 // pred_region
    _
  $region17: #{odefunc_forward.1} parent=0 // pred_fallthru
    _
  // Predicated region
  $region18: #{odefunc_forward.1} parent=0 // pred_check
    _
  $region19: #{odefunc_forward.1} parent=0 // pred_check_branch
    %19 = sbr.rel (0) target = $region21
  $region20: #{odefunc_forward.1} parent=0 // pred_region
    _
  $region21: #{odefunc_forward.1} parent=0 // pred_fallthru
    _
  %v21 = vld [vmem:[%s0] sm:$0xff]
  %v22 = vld [vmem:[%s0 + $0x8] sm:$0xff]
  %v23 = vpack.c.bf16 %v22, %v21
  %v24 = vld [vmem:[%s1] sm:$0xf]
  %v25 = vld [vmem:[%s1 + $0x4] sm:$0xf]
  %v26 = vld [vmem:[%s1 + $0x8] sm:$0xf]
  %v27 = vld [vmem:[%s1 + $0xc] sm:$0xf]
  %v28 = vld [vmem:[%s4] sm:$0x1]
  %v29 = vlaneseq
  %v30 = vshrl.u32 %v29, 7
  %v31 = vsub.s32 0, %v30
  %v32 = vrot.slane %v28, %v31
  %v37 = vunpack.c.l.b16 %v24
  %v38 = vunpack.c.l.b16 %v25
  %v39 = vunpack.c.l.b16 %v26
  %v40 = vunpack.c.l.b16 %v27
  %v41 = vpack.c.b16 %v38, %v37
  %v42 = vpack.c.b16 %v40, %v39
  %vm45 = vcmask 261120
  %v47 = vsel %vm45, %v23, 0
  %49 = vmatprep.subr.bf16.mxu0 0
  %50 = vmatpush1.bf16.msra.mxu0 %v41
  %51 = vmatprep.subr.bf16.mxu0 0
  %52 = vmatpush1.bf16.msra.mxu0 %v42
  %53 = vmatprep.subr.bf16.mxu0 0
  %54 = vmatpush1.bf16.msra.mxu0 0
  %55 = vmatprep.subr.bf16.mxu0 0
  %56 = vmatpush1.bf16.msra.mxu0 0
  %57 = vmatprep.subr.bf16.mxu0 0
  %58 = vmatpush1.bf16.msra.mxu0 0
  %59 = vmatprep.subr.bf16.mxu0 0
  %60 = vmatpush1.bf16.msra.mxu0 0
  %61 = vmatprep.subr.bf16.mxu0 0
  %62 = vmatpush1.bf16.msra.mxu0 0
  %63 = vmatprep.subr.bf16.mxu0 0
  %64 = vmatpush1.bf16.msra.mxu0 0
  %65 = vmatprep.subr.bf16.mxu0 0
  %66 = vmatpush1.bf16.msra.mxu0 0
  %67 = vmatprep.subr.bf16.mxu0 0
  %68 = vmatpush1.bf16.msra.mxu0 0
  %69 = vmatprep.subr.bf16.mxu0 0
  %70 = vmatpush1.bf16.msra.mxu0 0
  %71 = vmatprep.subr.bf16.mxu0 0
  %72 = vmatpush1.bf16.msra.mxu0 0
  %73 = vmatprep.subr.bf16.mxu0 0
  %74 = vmatpush1.bf16.msra.mxu0 0
  %75 = vmatprep.subr.bf16.mxu0 0
  %76 = vmatpush1.bf16.msra.mxu0 0
  %77 = vmatprep.subr.bf16.mxu0 0
  %78 = vmatpush1.bf16.msra.mxu0 0
  %79 = vmatprep.subr.bf16.mxu0 0
  %80 = vmatpush1.bf16.msra.mxu0 0
  %81 = vmatprep.mubr.bf16.mxu0 0
  %82 = vmatmul.mubr.bf16.gmra.mrb[0].mxu0 %v47
  %v83 = vpop.f32.mrb[0].mxu0
  %v84 = vadd.f32 %v32, %v83
  %v85 = vpop.f32.mrb[0].mxu0
  %v86 = vpop.f32.mrb[0].mxu0
  %v87 = vadd.f32 %v32, %v86
  %v88 = vpop.f32.mrb[0].mxu0
  %89 = vdwg.mxu0
  %v90 = vmax.f32 %v84, 0.0
  %v91 = vmax.f32 %v87, 0.0
  %v92 = vpack.c.bf16 %v91, %v90
  %v93 = vld [vmem:[%s2] sm:$0xf]
  %v94 = vld [vmem:[%s2 + $0x4] sm:$0xf]
  %v95 = vld [vmem:[%s2 + $0x8] sm:$0xf]
  %v96 = vld [vmem:[%s2 + $0xc] sm:$0xf]
  %v97 = vld [vmem:[%s2 + $0x10] sm:$0xf]
  %v98 = vld [vmem:[%s2 + $0x14] sm:$0xf]
  %v99 = vld [vmem:[%s2 + $0x18] sm:$0xf]
  %v100 = vld [vmem:[%s2 + $0x1c] sm:$0xf]
  %v101 = vld [vmem:[%s2 + $0x20] sm:$0xf]
  %v102 = vld [vmem:[%s2 + $0x24] sm:$0xf]
  %v103 = vld [vmem:[%s2 + $0x28] sm:$0xf]
  %v104 = vld [vmem:[%s2 + $0x2c] sm:$0xf]
  %v105 = vld [vmem:[%s2 + $0x30] sm:$0xf]
  %v106 = vld [vmem:[%s2 + $0x34] sm:$0xf]
  %v107 = vld [vmem:[%s2 + $0x38] sm:$0xf]
  %v108 = vld [vmem:[%s2 + $0x3c] sm:$0xf]
  %v109 = vld [vmem:[%s4 + $0x1] sm:$0x1]
  %v110 = vlaneseq
  %v111 = vshrl.u32 %v110, 7
  %v112 = vsub.s32 0, %v111
  %v113 = vrot.slane %v109, %v112
  %v130 = vunpack.c.l.b16 %v93
  %v131 = vunpack.c.l.b16 %v94
  %v132 = vunpack.c.l.b16 %v95
  %v133 = vunpack.c.l.b16 %v96
  %v134 = vunpack.c.l.b16 %v97
  %v135 = vunpack.c.l.b16 %v98
  %v136 = vunpack.c.l.b16 %v99
  %v137 = vunpack.c.l.b16 %v100
  %v138 = vunpack.c.l.b16 %v101
  %v139 = vunpack.c.l.b16 %v102
  %v140 = vunpack.c.l.b16 %v103
  %v141 = vunpack.c.l.b16 %v104
  %v142 = vunpack.c.l.b16 %v105
  %v143 = vunpack.c.l.b16 %v106
  %v144 = vunpack.c.l.b16 %v107
  %v145 = vunpack.c.l.b16 %v108
  %v146 = vpack.c.b16 %v131, %v130
  %v147 = vpack.c.b16 %v133, %v132
  %v148 = vpack.c.b16 %v135, %v134
  %v149 = vpack.c.b16 %v137, %v136
  %v150 = vpack.c.b16 %v139, %v138
  %v151 = vpack.c.b16 %v141, %v140
  %v152 = vpack.c.b16 %v143, %v142
  %v153 = vpack.c.b16 %v145, %v144
  %162 = vmatprep.subr.bf16.mxu0 0
  %163 = vmatpush1.bf16.msra.mxu0 %v146
  %164 = vmatprep.subr.bf16.mxu0 0
  %165 = vmatpush1.bf16.msra.mxu0 %v147
  %166 = vmatprep.subr.bf16.mxu0 0
  %167 = vmatpush1.bf16.msra.mxu0 %v148
  %168 = vmatprep.subr.bf16.mxu0 0
  %169 = vmatpush1.bf16.msra.mxu0 %v149
  %170 = vmatprep.subr.bf16.mxu0 0
  %171 = vmatpush1.bf16.msra.mxu0 %v150
  %172 = vmatprep.subr.bf16.mxu0 0
  %173 = vmatpush1.bf16.msra.mxu0 %v151
  %174 = vmatprep.subr.bf16.mxu0 0
  %175 = vmatpush1.bf16.msra.mxu0 %v152
  %176 = vmatprep.subr.bf16.mxu0 0
  %177 = vmatpush1.bf16.msra.mxu0 %v153
  %178 = vmatprep.subr.bf16.mxu0 0
  %179 = vmatpush1.bf16.msra.mxu0 0
  %180 = vmatprep.subr.bf16.mxu0 0
  %181 = vmatpush1.bf16.msra.mxu0 0
  %182 = vmatprep.subr.bf16.mxu0 0
  %183 = vmatpush1.bf16.msra.mxu0 0
  %184 = vmatprep.subr.bf16.mxu0 0
  %185 = vmatpush1.bf16.msra.mxu0 0
  %186 = vmatprep.subr.bf16.mxu0 0
  %187 = vmatpush1.bf16.msra.mxu0 0
  %188 = vmatprep.subr.bf16.mxu0 0
  %189 = vmatpush1.bf16.msra.mxu0 0
  %190 = vmatprep.subr.bf16.mxu0 0
  %191 = vmatpush1.bf16.msra.mxu0 0
  %192 = vmatprep.subr.bf16.mxu0 0
  %193 = vmatpush1.bf16.msra.mxu0 0
  %194 = vmatprep.mubr.bf16.mxu0 0
  %195 = vmatmul.mubr.bf16.gmra.mrb[0].mxu0 %v92
  %v196 = vpop.f32.mrb[0].mxu0
  %v197 = vadd.f32 %v113, %v196
  %v198 = vpop.f32.mrb[0].mxu0
  %v199 = vpop.f32.mrb[0].mxu0
  %v200 = vadd.f32 %v113, %v199
  %v201 = vpop.f32.mrb[0].mxu0
  %202 = vdwg.mxu0
  %v203 = vmax.f32 %v197, 0.0
  %v204 = vmax.f32 %v200, 0.0
  %v205 = vpack.c.bf16 %v204, %v203
  %v206 = vld [vmem:[%s3] sm:$0xf]
  %v207 = vld [vmem:[%s3 + $0x4] sm:$0xf]
  %v208 = vld [vmem:[%s3 + $0x8] sm:$0xf]
  %v209 = vld [vmem:[%s3 + $0xc] sm:$0xf]
  %v210 = vld [vmem:[%s3 + $0x10] sm:$0xf]
  %v211 = vld [vmem:[%s3 + $0x14] sm:$0xf]
  %v212 = vld [vmem:[%s3 + $0x18] sm:$0xf]
  %v213 = vld [vmem:[%s3 + $0x1c] sm:$0xf]
  %v214 = vld [vmem:[%s3 + $0x20] sm:$0xf]
  %v215 = vld [vmem:[%s3 + $0x24] sm:$0xf]
  %v216 = vld [vmem:[%s3 + $0x28] sm:$0xf]
  %v217 = vld [vmem:[%s3 + $0x2c] sm:$0xf]
  %v218 = vld [vmem:[%s3 + $0x30] sm:$0xf]
  %v219 = vld [vmem:[%s3 + $0x34] sm:$0xf]
  %v220 = vld [vmem:[%s3 + $0x38] sm:$0xf]
  %v221 = vld [vmem:[%s3 + $0x3c] sm:$0xf]
  %v222 = vld [vmem:[%s4 + $0x2] sm:$0x1]
  %v223 = vlaneseq
  %v224 = vshrl.u32 %v223, 7
  %v225 = vsub.s32 0, %v224
  %v226 = vrot.slane %v222, %v225
  %v243 = vunpack.c.l.b16 %v206
  %v244 = vunpack.c.l.b16 %v207
  %v245 = vunpack.c.l.b16 %v208
  %v246 = vunpack.c.l.b16 %v209
  %v247 = vunpack.c.l.b16 %v210
  %v248 = vunpack.c.l.b16 %v211
  %v249 = vunpack.c.l.b16 %v212
  %v250 = vunpack.c.l.b16 %v213
  %v251 = vunpack.c.l.b16 %v214
  %v252 = vunpack.c.l.b16 %v215
  %v253 = vunpack.c.l.b16 %v216
  %v254 = vunpack.c.l.b16 %v217
  %v255 = vunpack.c.l.b16 %v218
  %v256 = vunpack.c.l.b16 %v219
  %v257 = vunpack.c.l.b16 %v220
  %v258 = vunpack.c.l.b16 %v221
  %v259 = vpack.c.b16 %v244, %v243
  %v260 = vpack.c.b16 %v246, %v245
  %v261 = vpack.c.b16 %v248, %v247
  %v262 = vpack.c.b16 %v250, %v249
  %v263 = vpack.c.b16 %v252, %v251
  %v264 = vpack.c.b16 %v254, %v253
  %v265 = vpack.c.b16 %v256, %v255
  %v266 = vpack.c.b16 %v258, %v257
  %275 = vmatprep.subr.bf16.mxu0 0
  %276 = vmatpush1.bf16.msra.mxu0 %v259
  %277 = vmatprep.subr.bf16.mxu0 0
  %278 = vmatpush1.bf16.msra.mxu0 %v260
  %279 = vmatprep.subr.bf16.mxu0 0
  %280 = vmatpush1.bf16.msra.mxu0 %v261
  %281 = vmatprep.subr.bf16.mxu0 0
  %282 = vmatpush1.bf16.msra.mxu0 %v262
  %283 = vmatprep.subr.bf16.mxu0 0
  %284 = vmatpush1.bf16.msra.mxu0 %v263
  %285 = vmatprep.subr.bf16.mxu0 0
  %286 = vmatpush1.bf16.msra.mxu0 %v264
  %287 = vmatprep.subr.bf16.mxu0 0
  %288 = vmatpush1.bf16.msra.mxu0 %v265
  %289 = vmatprep.subr.bf16.mxu0 0
  %290 = vmatpush1.bf16.msra.mxu0 %v266
  %291 = vmatprep.subr.bf16.mxu0 0
  %292 = vmatpush1.bf16.msra.mxu0 0
  %293 = vmatprep.subr.bf16.mxu0 0
  %294 = vmatpush1.bf16.msra.mxu0 0
  %295 = vmatprep.subr.bf16.mxu0 0
  %296 = vmatpush1.bf16.msra.mxu0 0
  %297 = vmatprep.subr.bf16.mxu0 0
  %298 = vmatpush1.bf16.msra.mxu0 0
  %299 = vmatprep.subr.bf16.mxu0 0
  %300 = vmatpush1.bf16.msra.mxu0 0
  %301 = vmatprep.subr.bf16.mxu0 0
  %302 = vmatpush1.bf16.msra.mxu0 0
  %303 = vmatprep.subr.bf16.mxu0 0
  %304 = vmatpush1.bf16.msra.mxu0 0
  %305 = vmatprep.subr.bf16.mxu0 0
  %306 = vmatpush1.bf16.msra.mxu0 0
  %307 = vmatprep.mubr.bf16.mxu0 0
  %308 = vmatmul.mubr.bf16.gmra.mrb[0].mxu0 %v205
  %v309 = vpop.f32.mrb[0].mxu0
  %v310 = vadd.f32 %v226, %v309
  %v311 = vpop.f32.mrb[0].mxu0
  %v312 = vpop.f32.mrb[0].mxu0
  %v313 = vadd.f32 %v226, %v312
  %v314 = vpop.f32.mrb[0].mxu0
  %315 = vdwg.mxu0
  %v316 = vtanh.pop %v310
  %v317 = vtanh.pop %v313
  %318 = vst.msk [vmem:[%s5] sm:$0xff] %vm45, %v316
  %319 = vst.msk [vmem:[%s5 + $0x8] sm:$0xff] %vm45, %v317
  // Predicated region
  $region22: #{odefunc_forward.1} parent=0 // pred_check
    _
  $region23: #{odefunc_forward.1} parent=0 // pred_check_branch
    %321 = sbr.rel (0) target = $region25
  $region24: #{odefunc_forward.1} parent=0 // pred_region
    _
  $region25: #{odefunc_forward.1} parent=0 // pred_fallthru
    _
  // Predicated region
  $region26: #{odefunc_forward.1} parent=0 // pred_check
    _
  $region27: #{odefunc_forward.1} parent=0 // pred_check_branch
    %323 = sbr.rel (0) target = $region29
  $region28: #{odefunc_forward.1} parent=0 // pred_region
    _
  $region29: #{odefunc_forward.1} parent=0 // pred_fallthru
    _

</llo_original>
